<compile_context>
chip_gen: v5e
topology: v5e:2x2
jax: 0.10.0
libtpu: 0.0.40
codegen_flags: <defaults>
</compile_context>

<pallas_src>
import jax
import jax.numpy as jnp
from jax.experimental import pallas as pl
from jax.experimental.pallas import tpu as pltpu

OUTPUT_LAYER_SIZE = 10
LANE = 128      # pad every feature dim to a full 128-lane vreg width
TB_MAX = 512    # batch tile; 2 x TB x D_pad x 2B stays far under scoped VMEM on v5e/v6e/v7x


def _round_up(x, m):
    return (x + m - 1) // m * m


def _mlp_kernel(x_ref,
                w0_ref, b0_ref, w1_ref, b1_ref, w2_ref, b2_ref,
                w3_ref, b3_ref, w4_ref, b4_ref, w5_ref, b5_ref,
                out_ref):
    def sig_layer(h_bf16, w_ref, b_ref):
        y = jnp.dot(h_bf16, w_ref[...], preferred_element_type=jnp.float32)
        y = y + b_ref[...]
        # sigmoid in f32 (exp goes to the EUP), cast back to bf16 for the next MXU pass
        s = 1.0 / (1.0 + jnp.exp(-y))
        return s.astype(jnp.bfloat16)

    h = sig_layer(x_ref[...], w0_ref, b0_ref)   # image_size -> 128
    h = sig_layer(h, w1_ref, b1_ref)            # 128 -> 64 (padded to 128)
    h = sig_layer(h, w2_ref, b2_ref)            # 64  -> 10 (padded to 128)
    h = sig_layer(h, w3_ref, b3_ref)            # 10  -> 10 (padded to 128)
    h = sig_layer(h, w4_ref, b4_ref)            # 10  -> 10 (padded to 128)

    logits = jnp.dot(h, w5_ref[...], preferred_element_type=jnp.float32) + b5_ref[...]

    # mask zero-padded output lanes so they don't corrupt the log_softmax normalizer
    lane = jax.lax.broadcasted_iota(jnp.int32, logits.shape, dimension=1)
    logits = jnp.where(lane < OUTPUT_LAYER_SIZE, logits, jnp.float32(-1e30))

    m = jnp.max(logits, axis=-1, keepdims=True)
    shifted = logits - m
    lse = jnp.log(jnp.sum(jnp.exp(shifted), axis=-1, keepdims=True))
    out_ref[...] = (shifted - lse).astype(out_ref.dtype)


def _pad2d(a, rows, cols, dtype):
    out = jnp.zeros((rows, cols), dtype)
    return out.at[: a.shape[0], : a.shape[1]].set(a.astype(dtype))


def model_f_forward(x, params):
    """ModelF forward: 5x (linear+sigmoid) then linear + log_softmax. Returns (B, 10)."""
    (w0, b0), (w1, b1), (w2, b2), (w3, b3), (w4, b4), (w5, b5) = params
    image_size = w0.shape[0]

    x2d = x.reshape(-1, image_size)
    B = x2d.shape[0]

    d_pad = _round_up(image_size, LANE)

    # batch tile + batch padding so the grid divides evenly
    tb = min(TB_MAX, _round_up(B, 8))
    b_pad = _round_up(B, tb)

    xp = jnp.zeros((b_pad, d_pad), jnp.bfloat16)
    xp = xp.at[:B, :image_size].set(x2d.astype(jnp.bfloat16))

    # zero-pad weights/biases to 128-lane-dense shapes (bf16 weights, f32 biases)
    wp = [
        _pad2d(w0, d_pad, LANE, jnp.bfloat16),
        _pad2d(w1, LANE, LANE, jnp.bfloat16),
        _pad2d(w2, LANE, LANE, jnp.bfloat16),
        _pad2d(w3, LANE, LANE, jnp.bfloat16),
        _pad2d(w4, LANE, LANE, jnp.bfloat16),
        _pad2d(w5, LANE, LANE, jnp.bfloat16),
    ]
    bp = [_pad2d(b.reshape(1, -1), 1, LANE, jnp.float32)
          for b in (b0, b1, b2, b3, b4, b5)]

    grid = (b_pad // tb,)

    x_spec = pl.BlockSpec((tb, d_pad), lambda i: (i, 0))
    out_spec = pl.BlockSpec((tb, LANE), lambda i: (i, 0))

    def resident(shape):
        # full-array block, constant index_map -> loaded once, stays VMEM-resident
        return pl.BlockSpec(shape, lambda i: (0, 0))

    in_specs = [x_spec]
    operands = [xp]
    for w, b in zip(wp, bp):
        in_specs += [resident(w.shape), resident(b.shape)]
        operands += [w, b]

    flops = 2 * b_pad * (d_pad * LANE + 5 * LANE * LANE)
    transcendentals = b_pad * LANE * 6  # 5 sigmoid layers + exp in log_softmax
    bytes_accessed = (xp.size * 2
                      + sum(w.size * 2 for w in wp)
                      + sum(b.size * 4 for b in bp)
                      + b_pad * LANE * 4)

    out_padded = pl.pallas_call(
        _mlp_kernel,
        out_shape=jax.ShapeDtypeStruct((b_pad, LANE), jnp.float32),
        grid=grid,
        in_specs=in_specs,
        out_specs=out_spec,
        compiler_params=pltpu.CompilerParams(
            dimension_semantics=("parallel",),
        ),
        cost_estimate=pl.CostEstimate(
            flops=flops,
            transcendentals=transcendentals,
            bytes_accessed=bytes_accessed,
        ),
    )(*operands)

    return out_padded[:B, :OUTPUT_LAYER_SIZE]


def init_params(key, image_size):
    """Deterministic init mimicking nn.Linear default (uniform +- 1/sqrt(fan_in))."""
    dims = [image_size, 128, 64, 10, 10, 10, OUTPUT_LAYER_SIZE]
    keys = jax.random.split(key, 2 * (len(dims) - 1))
    params = []
    for li in range(len(dims) - 1):
        fan_in, fan_out = dims[li], dims[li + 1]
        bound = float(fan_in) ** -0.5
        kw, kb = keys[2 * li], keys[2 * li + 1]
        w = jax.random.uniform(kw, (fan_in, fan_out), jnp.float32, -bound, bound)
        b = jax.random.uniform(kb, (fan_out,), jnp.float32, -bound, bound)
        params.append((w, b))
    return params


def reference_forward(x, params):
    """Pure-JAX f32 reference of ModelF.forward."""
    h = x.reshape(-1, params[0][0].shape[0]).astype(jnp.float32)
    for w, b in params[:-1]:
        h = jax.nn.sigmoid(h @ w + b)
    w, b = params[-1]
    logits = h @ w + b
    return jax.nn.log_softmax(logits, axis=-1)


if __name__ == "__main__":
    key = jax.random.PRNGKey(0)
    image_size = 64          # small synthetic "image" (8x8 flattened)
    batch = 8

    kx, kp = jax.random.split(key)
    x = jax.random.normal(kx, (batch, 8, 8), jnp.float32)   # flattens to (8, 64)
    params = init_params(kp, image_size)

    out = jax.block_until_ready(model_f_forward(x, params))

    assert out.shape == (batch, OUTPUT_LAYER_SIZE)
    probs_sum = jnp.sum(jnp.exp(out), axis=-1)
    assert jnp.allclose(probs_sum, 1.0, atol=1e-4), probs_sum

    ref = reference_forward(x, params)
    assert jnp.allclose(out, ref, atol=0.1), float(jnp.max(jnp.abs(out - ref)))

    print("KERNEL_OK")
</pallas_src>

<mosaic_0001>
module attributes {stable_mosaic.version = 11 : i64} {
  func.func @_mlp_kernel(%arg0: i32, %arg1: memref<8x128xbf16, #tpu.memory_space<vmem>>, %arg2: memref<128x128xbf16, #tpu.memory_space<vmem>>, %arg3: memref<1x128xf32, #tpu.memory_space<vmem>>, %arg4: memref<128x128xbf16, #tpu.memory_space<vmem>>, %arg5: memref<1x128xf32, #tpu.memory_space<vmem>>, %arg6: memref<128x128xbf16, #tpu.memory_space<vmem>>, %arg7: memref<1x128xf32, #tpu.memory_space<vmem>>, %arg8: memref<128x128xbf16, #tpu.memory_space<vmem>>, %arg9: memref<1x128xf32, #tpu.memory_space<vmem>>, %arg10: memref<128x128xbf16, #tpu.memory_space<vmem>>, %arg11: memref<1x128xf32, #tpu.memory_space<vmem>>, %arg12: memref<128x128xbf16, #tpu.memory_space<vmem>>, %arg13: memref<1x128xf32, #tpu.memory_space<vmem>>, %arg14: memref<8x128xf32, #tpu.memory_space<vmem>>) attributes {dimension_semantics = [#tpu.dimension_semantics<parallel>], iteration_bounds = array<i64: 1>, scalar_prefetch = 0 : i64, scratch_operands = 0 : i64, tpu.core_type = #tpu.core_type<tc>, window_params = [{transform_indices = @transform_0, window_bounds = array<i64: 8, 128>}, {pipeline_mode = #tpu.pipeline_mode<synchronous>, transform_indices = @transform_1, window_bounds = array<i64: 128, 128>}, {pipeline_mode = #tpu.pipeline_mode<synchronous>, transform_indices = @transform_2, window_bounds = array<i64: 1, 128>}, {pipeline_mode = #tpu.pipeline_mode<synchronous>, transform_indices = @transform_3, window_bounds = array<i64: 128, 128>}, {pipeline_mode = #tpu.pipeline_mode<synchronous>, transform_indices = @transform_4, window_bounds = array<i64: 1, 128>}, {pipeline_mode = #tpu.pipeline_mode<synchronous>, transform_indices = @transform_5, window_bounds = array<i64: 128, 128>}, {pipeline_mode = #tpu.pipeline_mode<synchronous>, transform_indices = @transform_6, window_bounds = array<i64: 1, 128>}, {pipeline_mode = #tpu.pipeline_mode<synchronous>, transform_indices = @transform_7, window_bounds = array<i64: 128, 128>}, {pipeline_mode = #tpu.pipeline_mode<synchronous>, transform_indices = @transform_8, window_bounds = array<i64: 1, 128>}, {pipeline_mode = #tpu.pipeline_mode<synchronous>, transform_indices = @transform_9, window_bounds = array<i64: 128, 128>}, {pipeline_mode = #tpu.pipeline_mode<synchronous>, transform_indices = @transform_10, window_bounds = array<i64: 1, 128>}, {pipeline_mode = #tpu.pipeline_mode<synchronous>, transform_indices = @transform_11, window_bounds = array<i64: 128, 128>}, {pipeline_mode = #tpu.pipeline_mode<synchronous>, transform_indices = @transform_12, window_bounds = array<i64: 1, 128>}, {transform_indices = @transform_13, window_bounds = array<i64: 8, 128>}]} {
    %c0 = arith.constant 0 : index
    %c0_0 = arith.constant 0 : index
    %0 = vector.load %arg1[%c0, %c0_0] : memref<8x128xbf16, #tpu.memory_space<vmem>>, vector<8x128xbf16>
    %c0_1 = arith.constant 0 : index
    %c0_2 = arith.constant 0 : index
    %1 = vector.load %arg2[%c0_1, %c0_2] : memref<128x128xbf16, #tpu.memory_space<vmem>>, vector<128x128xbf16>
    %cst = arith.constant dense<0.000000e+00> : vector<8x128xf32>
    %2 = tpu.matmul %0, %1, %cst {dimension_numbers = #tpu.dot_dimension_numbers<[1], [0], [0], [1], [0, 0, 1, 1], [], []>} : vector<8x128xbf16>, vector<128x128xbf16>, vector<8x128xf32> -> vector<8x128xf32>
    %c0_3 = arith.constant 0 : index
    %c0_4 = arith.constant 0 : index
    %3 = vector.load %arg3[%c0_3, %c0_4] : memref<1x128xf32, #tpu.memory_space<vmem>>, vector<1x128xf32>
    %4 = vector.broadcast %3 : vector<1x128xf32> to vector<8x128xf32>
    %5 = arith.addf %2, %4 : vector<8x128xf32>
    %cst_5 = arith.constant 0.000000e+00 : f32
    %6 = vector.broadcast %cst_5 : f32 to vector<8x128xf32>
    %7 = arith.subf %6, %5 : vector<8x128xf32>
    %8 = math.exp %7 : vector<8x128xf32>
    %cst_6 = arith.constant 1.000000e+00 : f32
    %9 = vector.broadcast %cst_6 : f32 to vector<8x128xf32>
    %10 = arith.addf %9, %8 : vector<8x128xf32>
    %cst_7 = arith.constant 1.000000e+00 : f32
    %11 = vector.broadcast %cst_7 : f32 to vector<8x128xf32>
    %12 = arith.divf %11, %10 : vector<8x128xf32>
    %13 = arith.truncf %12 : vector<8x128xf32> to vector<8x128xbf16>
    %c0_8 = arith.constant 0 : index
    %c0_9 = arith.constant 0 : index
    %14 = vector.load %arg4[%c0_8, %c0_9] : memref<128x128xbf16, #tpu.memory_space<vmem>>, vector<128x128xbf16>
    %cst_10 = arith.constant dense<0.000000e+00> : vector<8x128xf32>
    %15 = tpu.matmul %13, %14, %cst_10 {dimension_numbers = #tpu.dot_dimension_numbers<[1], [0], [0], [1], [0, 0, 1, 1], [], []>} : vector<8x128xbf16>, vector<128x128xbf16>, vector<8x128xf32> -> vector<8x128xf32>
    %c0_11 = arith.constant 0 : index
    %c0_12 = arith.constant 0 : index
    %16 = vector.load %arg5[%c0_11, %c0_12] : memref<1x128xf32, #tpu.memory_space<vmem>>, vector<1x128xf32>
    %17 = vector.broadcast %16 : vector<1x128xf32> to vector<8x128xf32>
    %18 = arith.addf %15, %17 : vector<8x128xf32>
    %cst_13 = arith.constant 0.000000e+00 : f32
    %19 = vector.broadcast %cst_13 : f32 to vector<8x128xf32>
    %20 = arith.subf %19, %18 : vector<8x128xf32>
    %21 = math.exp %20 : vector<8x128xf32>
    %cst_14 = arith.constant 1.000000e+00 : f32
    %22 = vector.broadcast %cst_14 : f32 to vector<8x128xf32>
    %23 = arith.addf %22, %21 : vector<8x128xf32>
    %cst_15 = arith.constant 1.000000e+00 : f32
    %24 = vector.broadcast %cst_15 : f32 to vector<8x128xf32>
    %25 = arith.divf %24, %23 : vector<8x128xf32>
    %26 = arith.truncf %25 : vector<8x128xf32> to vector<8x128xbf16>
    %c0_16 = arith.constant 0 : index
    %c0_17 = arith.constant 0 : index
    %27 = vector.load %arg6[%c0_16, %c0_17] : memref<128x128xbf16, #tpu.memory_space<vmem>>, vector<128x128xbf16>
    %cst_18 = arith.constant dense<0.000000e+00> : vector<8x128xf32>
    %28 = tpu.matmul %26, %27, %cst_18 {dimension_numbers = #tpu.dot_dimension_numbers<[1], [0], [0], [1], [0, 0, 1, 1], [], []>} : vector<8x128xbf16>, vector<128x128xbf16>, vector<8x128xf32> -> vector<8x128xf32>
    %c0_19 = arith.constant 0 : index
    %c0_20 = arith.constant 0 : index
    %29 = vector.load %arg7[%c0_19, %c0_20] : memref<1x128xf32, #tpu.memory_space<vmem>>, vector<1x128xf32>
    %30 = vector.broadcast %29 : vector<1x128xf32> to vector<8x128xf32>
    %31 = arith.addf %28, %30 : vector<8x128xf32>
    %cst_21 = arith.constant 0.000000e+00 : f32
    %32 = vector.broadcast %cst_21 : f32 to vector<8x128xf32>
    %33 = arith.subf %32, %31 : vector<8x128xf32>
    %34 = math.exp %33 : vector<8x128xf32>
    %cst_22 = arith.constant 1.000000e+00 : f32
    %35 = vector.broadcast %cst_22 : f32 to vector<8x128xf32>
    %36 = arith.addf %35, %34 : vector<8x128xf32>
    %cst_23 = arith.constant 1.000000e+00 : f32
    %37 = vector.broadcast %cst_23 : f32 to vector<8x128xf32>
    %38 = arith.divf %37, %36 : vector<8x128xf32>
    %39 = arith.truncf %38 : vector<8x128xf32> to vector<8x128xbf16>
    %c0_24 = arith.constant 0 : index
    %c0_25 = arith.constant 0 : index
    %40 = vector.load %arg8[%c0_24, %c0_25] : memref<128x128xbf16, #tpu.memory_space<vmem>>, vector<128x128xbf16>
    %cst_26 = arith.constant dense<0.000000e+00> : vector<8x128xf32>
    %41 = tpu.matmul %39, %40, %cst_26 {dimension_numbers = #tpu.dot_dimension_numbers<[1], [0], [0], [1], [0, 0, 1, 1], [], []>} : vector<8x128xbf16>, vector<128x128xbf16>, vector<8x128xf32> -> vector<8x128xf32>
    %c0_27 = arith.constant 0 : index
    %c0_28 = arith.constant 0 : index
    %42 = vector.load %arg9[%c0_27, %c0_28] : memref<1x128xf32, #tpu.memory_space<vmem>>, vector<1x128xf32>
    %43 = vector.broadcast %42 : vector<1x128xf32> to vector<8x128xf32>
    %44 = arith.addf %41, %43 : vector<8x128xf32>
    %cst_29 = arith.constant 0.000000e+00 : f32
    %45 = vector.broadcast %cst_29 : f32 to vector<8x128xf32>
    %46 = arith.subf %45, %44 : vector<8x128xf32>
    %47 = math.exp %46 : vector<8x128xf32>
    %cst_30 = arith.constant 1.000000e+00 : f32
    %48 = vector.broadcast %cst_30 : f32 to vector<8x128xf32>
    %49 = arith.addf %48, %47 : vector<8x128xf32>
    %cst_31 = arith.constant 1.000000e+00 : f32
    %50 = vector.broadcast %cst_31 : f32 to vector<8x128xf32>
    %51 = arith.divf %50, %49 : vector<8x128xf32>
    %52 = arith.truncf %51 : vector<8x128xf32> to vector<8x128xbf16>
    %c0_32 = arith.constant 0 : index
    %c0_33 = arith.constant 0 : index
    %53 = vector.load %arg10[%c0_32, %c0_33] : memref<128x128xbf16, #tpu.memory_space<vmem>>, vector<128x128xbf16>
    %cst_34 = arith.constant dense<0.000000e+00> : vector<8x128xf32>
    %54 = tpu.matmul %52, %53, %cst_34 {dimension_numbers = #tpu.dot_dimension_numbers<[1], [0], [0], [1], [0, 0, 1, 1], [], []>} : vector<8x128xbf16>, vector<128x128xbf16>, vector<8x128xf32> -> vector<8x128xf32>
    %c0_35 = arith.constant 0 : index
    %c0_36 = arith.constant 0 : index
    %55 = vector.load %arg11[%c0_35, %c0_36] : memref<1x128xf32, #tpu.memory_space<vmem>>, vector<1x128xf32>
    %56 = vector.broadcast %55 : vector<1x128xf32> to vector<8x128xf32>
    %57 = arith.addf %54, %56 : vector<8x128xf32>
    %cst_37 = arith.constant 0.000000e+00 : f32
    %58 = vector.broadcast %cst_37 : f32 to vector<8x128xf32>
    %59 = arith.subf %58, %57 : vector<8x128xf32>
    %60 = math.exp %59 : vector<8x128xf32>
    %cst_38 = arith.constant 1.000000e+00 : f32
    %61 = vector.broadcast %cst_38 : f32 to vector<8x128xf32>
    %62 = arith.addf %61, %60 : vector<8x128xf32>
    %cst_39 = arith.constant 1.000000e+00 : f32
    %63 = vector.broadcast %cst_39 : f32 to vector<8x128xf32>
    %64 = arith.divf %63, %62 : vector<8x128xf32>
    %65 = arith.truncf %64 : vector<8x128xf32> to vector<8x128xbf16>
    %c0_40 = arith.constant 0 : index
    %c0_41 = arith.constant 0 : index
    %66 = vector.load %arg12[%c0_40, %c0_41] : memref<128x128xbf16, #tpu.memory_space<vmem>>, vector<128x128xbf16>
    %cst_42 = arith.constant dense<0.000000e+00> : vector<8x128xf32>
    %67 = tpu.matmul %65, %66, %cst_42 {dimension_numbers = #tpu.dot_dimension_numbers<[1], [0], [0], [1], [0, 0, 1, 1], [], []>} : vector<8x128xbf16>, vector<128x128xbf16>, vector<8x128xf32> -> vector<8x128xf32>
    %c0_43 = arith.constant 0 : index
    %c0_44 = arith.constant 0 : index
    %68 = vector.load %arg13[%c0_43, %c0_44] : memref<1x128xf32, #tpu.memory_space<vmem>>, vector<1x128xf32>
    %69 = vector.broadcast %68 : vector<1x128xf32> to vector<8x128xf32>
    %70 = arith.addf %67, %69 : vector<8x128xf32>
    %71 = tpu.iota {dimensions = array<i32: 1>} : vector<8x128xi32>
    %c10_i32 = arith.constant 10 : i32
    %72 = vector.broadcast %c10_i32 : i32 to vector<8x128xi32>
    %73 = arith.cmpi slt, %71, %72 : vector<8x128xi32>
    %cst_45 = arith.constant -1.000000e+30 : f32
    %74 = vector.broadcast %cst_45 : f32 to vector<8x128xf32>
    %75 = arith.select %73, %70, %74 : vector<8x128xi1>, vector<8x128xf32>
    %cst_46 = arith.constant dense<0xFF800000> : vector<8xf32>
    %76 = vector.multi_reduction <maximumf>, %75, %cst_46 [1] : vector<8x128xf32> to vector<8xf32>
    %77 = vector.shape_cast %76 : vector<8xf32> to vector<8x1xf32>
    %78 = vector.broadcast %77 : vector<8x1xf32> to vector<8x128xf32>
    %79 = arith.subf %75, %78 : vector<8x128xf32>
    %80 = math.exp %79 : vector<8x128xf32>
    %cst_47 = arith.constant dense<0.000000e+00> : vector<8xf32>
    %81 = vector.multi_reduction <add>, %80, %cst_47 [1] : vector<8x128xf32> to vector<8xf32>
    %82 = vector.shape_cast %81 : vector<8xf32> to vector<8x1xf32>
    %83 = math.log %82 : vector<8x1xf32>
    %84 = vector.broadcast %83 : vector<8x1xf32> to vector<8x128xf32>
    %85 = arith.subf %79, %84 : vector<8x128xf32>
    %c0_48 = arith.constant 0 : index
    %c0_49 = arith.constant 0 : index
    %86 = vector.load %arg14[%c0_48, %c0_49] : memref<8x128xf32, #tpu.memory_space<vmem>>, vector<8x128xf32>
    tpu.vector_store %arg14[%c0_48, %c0_49], %85 {strides = array<i32>} : memref<8x128xf32, #tpu.memory_space<vmem>>, vector<8x128xf32>,
    return
  }
  func.func @transform_0(%arg0: i32) -> (i32, i32) {
    %c0_i32 = arith.constant 0 : i32
    %c0_i32_0 = arith.constant 0 : i32
    return %arg0, %c0_i32 : i32, i32
  }
  func.func @transform_1(%arg0: i32) -> (i32, i32) {
    %c0_i32 = arith.constant 0 : i32
    %c0_i32_0 = arith.constant 0 : i32
    %c0_i32_1 = arith.constant 0 : i32
    return %c0_i32, %c0_i32_0 : i32, i32
  }
  func.func @transform_2(%arg0: i32) -> (i32, i32) {
    %c0_i32 = arith.constant 0 : i32
    %c0_i32_0 = arith.constant 0 : i32
    %c0_i32_1 = arith.constant 0 : i32
    return %c0_i32, %c0_i32_0 : i32, i32
  }
  func.func @transform_3(%arg0: i32) -> (i32, i32) {
    %c0_i32 = arith.constant 0 : i32
    %c0_i32_0 = arith.constant 0 : i32
    %c0_i32_1 = arith.constant 0 : i32
    return %c0_i32, %c0_i32_0 : i32, i32
  }
  func.func @transform_4(%arg0: i32) -> (i32, i32) {
    %c0_i32 = arith.constant 0 : i32
    %c0_i32_0 = arith.constant 0 : i32
    %c0_i32_1 = arith.constant 0 : i32
    return %c0_i32, %c0_i32_0 : i32, i32
  }
  func.func @transform_5(%arg0: i32) -> (i32, i32) {
    %c0_i32 = arith.constant 0 : i32
    %c0_i32_0 = arith.constant 0 : i32
    %c0_i32_1 = arith.constant 0 : i32
    return %c0_i32, %c0_i32_0 : i32, i32
  }
  func.func @transform_6(%arg0: i32) -> (i32, i32) {
    %c0_i32 = arith.constant 0 : i32
    %c0_i32_0 = arith.constant 0 : i32
    %c0_i32_1 = arith.constant 0 : i32
    return %c0_i32, %c0_i32_0 : i32, i32
  }
  func.func @transform_7(%arg0: i32) -> (i32, i32) {
    %c0_i32 = arith.constant 0 : i32
    %c0_i32_0 = arith.constant 0 : i32
    %c0_i32_1 = arith.constant 0 : i32
    return %c0_i32, %c0_i32_0 : i32, i32
  }
  func.func @transform_8(%arg0: i32) -> (i32, i32) {
    %c0_i32 = arith.constant 0 : i32
    %c0_i32_0 = arith.constant 0 : i32
    %c0_i32_1 = arith.constant 0 : i32
    return %c0_i32, %c0_i32_0 : i32, i32
  }
  func.func @transform_9(%arg0: i32) -> (i32, i32) {
    %c0_i32 = arith.constant 0 : i32
    %c0_i32_0 = arith.constant 0 : i32
    %c0_i32_1 = arith.constant 0 : i32
    return %c0_i32, %c0_i32_0 : i32, i32
  }
  func.func @transform_10(%arg0: i32) -> (i32, i32) {
    %c0_i32 = arith.constant 0 : i32
    %c0_i32_0 = arith.constant 0 : i32
    %c0_i32_1 = arith.constant 0 : i32
    return %c0_i32, %c0_i32_0 : i32, i32
  }
  func.func @transform_11(%arg0: i32) -> (i32, i32) {
    %c0_i32 = arith.constant 0 : i32
    %c0_i32_0 = arith.constant 0 : i32
    %c0_i32_1 = arith.constant 0 : i32
    return %c0_i32, %c0_i32_0 : i32, i32
  }
  func.func @transform_12(%arg0: i32) -> (i32, i32) {
    %c0_i32 = arith.constant 0 : i32
    %c0_i32_0 = arith.constant 0 : i32
    %c0_i32_1 = arith.constant 0 : i32
    return %c0_i32, %c0_i32_0 : i32, i32
  }
  func.func @transform_13(%arg0: i32) -> (i32, i32) {
    %c0_i32 = arith.constant 0 : i32
    %c0_i32_0 = arith.constant 0 : i32
    return %arg0, %c0_i32 : i32, i32
  }
}

</mosaic_0001>

<llo_original>
// kernel: tpu_custom_call.1
$region0: #{tpu_custom_call.1}
  #allocation0 [shape = 'u32[]', space=smem, size = 0x4, offset = 0x4, fixed_abs, tag = 'smem constant byte address 0x4 - core index']
  #allocation1 [shape = 'u32[72,128]{1,0:T(1,128)}', space=vmem, size = 0x9000, scoped, tag = 'internal scratch']
  %s0 = inlined_call_operand.hbm [shape: bf16[8,128], index: 0, kind: input, shape index: {}]
  %s1 = inlined_call_operand.hbm [shape: bf16[128,128], index: 1, kind: input, shape index: {}]
  %s2 = inlined_call_operand.vmem [shape: f32[1,128], index: 2, kind: input, shape index: {}]
  %s3 = inlined_call_operand.hbm [shape: bf16[128,128], index: 3, kind: input, shape index: {}]
  %s4 = inlined_call_operand.vmem [shape: f32[1,128], index: 4, kind: input, shape index: {}]
  %s5 = inlined_call_operand.hbm [shape: bf16[128,128], index: 5, kind: input, shape index: {}]
  %s6 = inlined_call_operand.vmem [shape: f32[1,128], index: 6, kind: input, shape index: {}]
  %s7 = inlined_call_operand.hbm [shape: bf16[128,128], index: 7, kind: input, shape index: {}]
  %s8 = inlined_call_operand.vmem [shape: f32[1,128], index: 8, kind: input, shape index: {}]
  %s9 = inlined_call_operand.hbm [shape: bf16[128,128], index: 9, kind: input, shape index: {}]
  %s10 = inlined_call_operand.vmem [shape: f32[1,128], index: 10, kind: input, shape index: {}]
  %s11 = inlined_call_operand.hbm [shape: bf16[128,128], index: 11, kind: input, shape index: {}]
  %s12 = inlined_call_operand.vmem [shape: f32[1,128], index: 12, kind: input, shape index: {}]
  %s13 = inlined_call_operand.hbm [shape: f32[8,128], index: 13, kind: output, shape index: {}]
  %s14 = sld [smem:[#allocation0]]
  $region90: #{tpu_custom_call.1} parent=0
    _
  %s16 = ssub.s32 1, %s14
  %s17 = scalar_select 0, %s16, %s14
  $region1: #{tpu_custom_call.1} parent=0
    #allocation2 [shape = 'u8[2048]{0}', space=vmem, size = 0x800, scoped, tag = 'input window, operand 0, single buffered']
    #allocation3 [shape = 's32[1]{0}', space=sflag, size = 0x4, scoped, tag = 'scoped memory for tpu_custom_call.1']
    #allocation4 [shape = 's32[1]{0}', space=sflag, size = 0x4, scoped, tag = 'scoped memory for tpu_custom_call.1']
    #allocation5 [shape = 'u8[32768]{0}', space=vmem, size = 0x8000, scoped, tag = 'input window, operand 1, single buffered']
    #allocation6 [shape = 's32[1]{0}', space=sflag, size = 0x4, scoped, tag = 'scoped memory for tpu_custom_call.1']
    #allocation7 [shape = 'u8[32768]{0}', space=vmem, size = 0x8000, scoped, tag = 'input window, operand 3, single buffered']
    #allocation8 [shape = 'u8[32768]{0}', space=vmem, size = 0x8000, scoped, tag = 'input window, operand 5, single buffered']
    #allocation9 [shape = 's32[1]{0}', space=sflag, size = 0x4, scoped, tag = 'scoped memory for tpu_custom_call.1']
    #allocation10 [shape = 'u8[32768]{0}', space=vmem, size = 0x8000, scoped, tag = 'input window, operand 7, single buffered']
    #allocation11 [shape = 'u8[32768]{0}', space=vmem, size = 0x8000, scoped, tag = 'input window, operand 9, single buffered']
    #allocation12 [shape = 's32[1]{0}', space=sflag, size = 0x4, scoped, tag = 'scoped memory for tpu_custom_call.1']
    #allocation13 [shape = 'u8[32768]{0}', space=vmem, size = 0x8000, scoped, tag = 'input window, operand 11, single buffered']
    #allocation14 [shape = 'u8[4096]{0}', space=vmem, size = 0x1000, scoped, tag = 'output window, operand 0, single buffered']
    %18 = vsyncpa [#allocation3], 0
    %19 = vsyncpa [#allocation6], 0
    %20 = vsyncpa [#allocation9], 0
    %21 = vsyncpa [#allocation12], 0
    %22 = vsyncpa [#allocation4], 0
    // Predicated region
    $region2: #{tpu_custom_call.1} parent=1 // pred_check
      _
    $region3: #{tpu_custom_call.1} parent=1 // pred_check_branch
      %24 = sbr.rel (0) target = $region5
    $region4: #{tpu_custom_call.1} parent=1 // pred_region
      %26 = vsyncadd [#allocation3], 0
      %s28 = sshll.u32 %s0, 4
      %s29 = int_to_ptr.hbm [resolvable:$true] %s28
      %s30 = sshll.u32 [#allocation2], 4
      %s31 = int_to_ptr.vmem [resolvable:$true] %s30
      %33 = dma.hbm_to_vmem [thread:$0]  %s29, 64, %s31, [#allocation3]
    $region5: #{tpu_custom_call.1} parent=1 // pred_fallthru
      _
    // Predicated region
    $region6: #{tpu_custom_call.1} parent=1 // pred_check
      _
    $region7: #{tpu_custom_call.1} parent=1 // pred_check_branch
      %35 = sbr.rel (0) target = $region9
    $region8: #{tpu_custom_call.1} parent=1 // pred_region
      %37 = vsyncadd [#allocation6], 0
      %s38 = sshll.u32 %s1, 4
      %s39 = int_to_ptr.hbm [resolvable:$true] %s38
      %s40 = sshll.u32 [#allocation5], 4
      %s41 = int_to_ptr.vmem [resolvable:$true] %s40
      %46 = dma.hbm_to_vmem [thread:$0]  %s39, 1024, %s41, [#allocation6], 64, 64, 4
    $region9: #{tpu_custom_call.1} parent=1 // pred_fallthru
      _
    // Predicated region
    $region10: #{tpu_custom_call.1} parent=1 // pred_check
      _
    $region11: #{tpu_custom_call.1} parent=1 // pred_check_branch
      %48 = sbr.rel (0) target = $region13
    $region12: #{tpu_custom_call.1} parent=1 // pred_region
      _
    $region13: #{tpu_custom_call.1} parent=1 // pred_fallthru
      _
    // Predicated region
    $region14: #{tpu_custom_call.1} parent=1 // pred_check
      _
    $region15: #{tpu_custom_call.1} parent=1 // pred_check_branch
      %50 = sbr.rel (0) target = $region17
    $region16: #{tpu_custom_call.1} parent=1 // pred_region
      %52 = vsyncadd [#allocation6], 0
      %s53 = sshll.u32 %s3, 4
      %s54 = int_to_ptr.hbm [resolvable:$true] %s53
      %s55 = sshll.u32 [#allocation7], 4
      %s56 = int_to_ptr.vmem [resolvable:$true] %s55
      %61 = dma.hbm_to_vmem [thread:$0]  %s54, 1024, %s56, [#allocation6], 64, 64, 4
    $region17: #{tpu_custom_call.1} parent=1 // pred_fallthru
      _
    // Predicated region
    $region18: #{tpu_custom_call.1} parent=1 // pred_check
      _
    $region19: #{tpu_custom_call.1} parent=1 // pred_check_branch
      %63 = sbr.rel (0) target = $region21
    $region20: #{tpu_custom_call.1} parent=1 // pred_region
      _
    $region21: #{tpu_custom_call.1} parent=1 // pred_fallthru
      _
    // Predicated region
    $region22: #{tpu_custom_call.1} parent=1 // pred_check
      _
    $region23: #{tpu_custom_call.1} parent=1 // pred_check_branch
      %65 = sbr.rel (0) target = $region25
    $region24: #{tpu_custom_call.1} parent=1 // pred_region
      %67 = vsyncadd [#allocation9], 0
      %s68 = sshll.u32 %s5, 4
      %s69 = int_to_ptr.hbm [resolvable:$true] %s68
      %s70 = sshll.u32 [#allocation8], 4
      %s71 = int_to_ptr.vmem [resolvable:$true] %s70
      %76 = dma.hbm_to_vmem [thread:$0]  %s69, 1024, %s71, [#allocation9], 64, 64, 4
    $region25: #{tpu_custom_call.1} parent=1 // pred_fallthru
      _
    // Predicated region
    $region26: #{tpu_custom_call.1} parent=1 // pred_check
      _
    $region27: #{tpu_custom_call.1} parent=1 // pred_check_branch
      %78 = sbr.rel (0) target = $region29
    $region28: #{tpu_custom_call.1} parent=1 // pred_region
      _
    $region29: #{tpu_custom_call.1} parent=1 // pred_fallthru
      _
    // Predicated region
    $region30: #{tpu_custom_call.1} parent=1 // pred_check
      _
    $region31: #{tpu_custom_call.1} parent=1 // pred_check_branch
      %80 = sbr.rel (0) target = $region33
    $region32: #{tpu_custom_call.1} parent=1 // pred_region
      %82 = vsyncadd [#allocation9], 0
      %s83 = sshll.u32 %s7, 4
      %s84 = int_to_ptr.hbm [resolvable:$true] %s83
      %s85 = sshll.u32 [#allocation10], 4
      %s86 = int_to_ptr.vmem [resolvable:$true] %s85
      %91 = dma.hbm_to_vmem [thread:$0]  %s84, 1024, %s86, [#allocation9], 64, 64, 4
    $region33: #{tpu_custom_call.1} parent=1 // pred_fallthru
      _
    // Predicated region
    $region34: #{tpu_custom_call.1} parent=1 // pred_check
      _
    $region35: #{tpu_custom_call.1} parent=1 // pred_check_branch
      %93 = sbr.rel (0) target = $region37
    $region36: #{tpu_custom_call.1} parent=1 // pred_region
      _
    $region37: #{tpu_custom_call.1} parent=1 // pred_fallthru
      _
    // Predicated region
    $region38: #{tpu_custom_call.1} parent=1 // pred_check
      _
    $region39: #{tpu_custom_call.1} parent=1 // pred_check_branch
      %95 = sbr.rel (0) target = $region41
    $region40: #{tpu_custom_call.1} parent=1 // pred_region
      %97 = vsyncadd [#allocation12], 0
      %s98 = sshll.u32 %s9, 4
      %s99 = int_to_ptr.hbm [resolvable:$true] %s98
      %s100 = sshll.u32 [#allocation11], 4
      %s101 = int_to_ptr.vmem [resolvable:$true] %s100
      %106 = dma.hbm_to_vmem [thread:$0]  %s99, 1024, %s101, [#allocation12], 64, 64, 4
    $region41: #{tpu_custom_call.1} parent=1 // pred_fallthru
      _
    // Predicated region
    $region42: #{tpu_custom_call.1} parent=1 // pred_check
      _
    $region43: #{tpu_custom_call.1} parent=1 // pred_check_branch
      %108 = sbr.rel (0) target = $region45
    $region44: #{tpu_custom_call.1} parent=1 // pred_region
      _
    $region45: #{tpu_custom_call.1} parent=1 // pred_fallthru
      _
    // Predicated region
    $region46: #{tpu_custom_call.1} parent=1 // pred_check
      _
    $region47: #{tpu_custom_call.1} parent=1 // pred_check_branch
      %110 = sbr.rel (0) target = $region49
    $region48: #{tpu_custom_call.1} parent=1 // pred_region
      %112 = vsyncadd [#allocation12], 0
      %s113 = sshll.u32 %s11, 4
      %s114 = int_to_ptr.hbm [resolvable:$true] %s113
      %s115 = sshll.u32 [#allocation13], 4
      %s116 = int_to_ptr.vmem [resolvable:$true] %s115
      %121 = dma.hbm_to_vmem [thread:$0]  %s114, 1024, %s116, [#allocation12], 64, 64, 4
    $region49: #{tpu_custom_call.1} parent=1 // pred_fallthru
      _
    // Predicated region
    $region50: #{tpu_custom_call.1} parent=1 // pred_check
      _
    $region51: #{tpu_custom_call.1} parent=1 // pred_check_branch
      %123 = sbr.rel (0) target = $region53
    $region52: #{tpu_custom_call.1} parent=1 // pred_region
      _
    $region53: #{tpu_custom_call.1} parent=1 // pred_fallthru
      _
    // Predicated region
    $region54: #{tpu_custom_call.1} parent=1 // pred_check
      _
    $region55: #{tpu_custom_call.1} parent=1 // pred_check_branch
      %125 = sbr.rel (0) target = $region57
    $region56: #{tpu_custom_call.1} parent=1 // pred_region
      %127 = dma.done [#allocation3], 64
    $region57: #{tpu_custom_call.1} parent=1 // pred_fallthru
      _
    // Predicated region
    $region58: #{tpu_custom_call.1} parent=1 // pred_check
      _
    $region59: #{tpu_custom_call.1} parent=1 // pred_check_branch
      %129 = sbr.rel (0) target = $region61
    $region60: #{tpu_custom_call.1} parent=1 // pred_region
      %131 = dma.done [#allocation6], 1024
    $region61: #{tpu_custom_call.1} parent=1 // pred_fallthru
      _
    // Predicated region
    $region62: #{tpu_custom_call.1} parent=1 // pred_check
      _
    $region63: #{tpu_custom_call.1} parent=1 // pred_check_branch
      %133 = sbr.rel (0) target = $region65
    $region64: #{tpu_custom_call.1} parent=1 // pred_region
      %135 = dma.done [#allocation6], 1024
    $region65: #{tpu_custom_call.1} parent=1 // pred_fallthru
      _
    // Predicated region
    $region66: #{tpu_custom_call.1} parent=1 // pred_check
      _
    $region67: #{tpu_custom_call.1} parent=1 // pred_check_branch
      %137 = sbr.rel (0) target = $region69
    $region68: #{tpu_custom_call.1} parent=1 // pred_region
      %139 = dma.done [#allocation9], 1024
    $region69: #{tpu_custom_call.1} parent=1 // pred_fallthru
      _
    // Predicated region
    $region70: #{tpu_custom_call.1} parent=1 // pred_check
      _
    $region71: #{tpu_custom_call.1} parent=1 // pred_check_branch
      %141 = sbr.rel (0) target = $region73
    $region72: #{tpu_custom_call.1} parent=1 // pred_region
      %143 = dma.done [#allocation9], 1024
    $region73: #{tpu_custom_call.1} parent=1 // pred_fallthru
      _
    // Predicated region
    $region74: #{tpu_custom_call.1} parent=1 // pred_check
      _
    $region75: #{tpu_custom_call.1} parent=1 // pred_check_branch
      %145 = sbr.rel (0) target = $region77
    $region76: #{tpu_custom_call.1} parent=1 // pred_region
      %147 = dma.done [#allocation12], 1024
    $region77: #{tpu_custom_call.1} parent=1 // pred_fallthru
      _
    // Predicated region
    $region78: #{tpu_custom_call.1} parent=1 // pred_check
      _
    $region79: #{tpu_custom_call.1} parent=1 // pred_check_branch
      %149 = sbr.rel (0) target = $region81
    $region80: #{tpu_custom_call.1} parent=1 // pred_region
      %151 = dma.done [#allocation12], 1024
    $region81: #{tpu_custom_call.1} parent=1 // pred_fallthru
      _
    %v152 = vld [vmem:[#allocation2] sm:$0xf]
    %v153 = vld [vmem:[#allocation5] sm:$0xf]
    %v154 = vld [vmem:[#allocation5 + $0x4] sm:$0xf]
    %v155 = vld [vmem:[#allocation5 + $0x8] sm:$0xf]
    %v156 = vld [vmem:[#allocation5 + $0xc] sm:$0xf]
    %v157 = vld [vmem:[#allocation5 + $0x10] sm:$0xf]
    %v158 = vld [vmem:[#allocation5 + $0x14] sm:$0xf]
    %v159 = vld [vmem:[#allocation5 + $0x18] sm:$0xf]
    %v160 = vld [vmem:[#allocation5 + $0x1c] sm:$0xf]
    %v161 = vld [vmem:[#allocation5 + $0x20] sm:$0xf]
    %v162 = vld [vmem:[#allocation5 + $0x24] sm:$0xf]
    %v163 = vld [vmem:[#allocation5 + $0x28] sm:$0xf]
    %v164 = vld [vmem:[#allocation5 + $0x2c] sm:$0xf]
    %v165 = vld [vmem:[#allocation5 + $0x30] sm:$0xf]
    %v166 = vld [vmem:[#allocation5 + $0x34] sm:$0xf]
    %v167 = vld [vmem:[#allocation5 + $0x38] sm:$0xf]
    %v168 = vld [vmem:[#allocation5 + $0x3c] sm:$0xf]
    %v169 = vld [vmem:[%s2] sm:$0x1]
    %v171 = vperm.slane %v169, 0
    %v189 = vunpack.c.l.b16 %v153
    %v190 = vunpack.c.l.b16 %v154
    %v191 = vunpack.c.l.b16 %v155
    %v192 = vunpack.c.l.b16 %v156
    %v193 = vunpack.c.l.b16 %v157
    %v194 = vunpack.c.l.b16 %v158
    %v195 = vunpack.c.l.b16 %v159
    %v196 = vunpack.c.l.b16 %v160
    %v197 = vunpack.c.l.b16 %v161
    %v198 = vunpack.c.l.b16 %v162
    %v199 = vunpack.c.l.b16 %v163
    %v200 = vunpack.c.l.b16 %v164
    %v201 = vunpack.c.l.b16 %v165
    %v202 = vunpack.c.l.b16 %v166
    %v203 = vunpack.c.l.b16 %v167
    %v204 = vunpack.c.l.b16 %v168
    %v205 = vpack.c.b16 %v190, %v189
    %v206 = vpack.c.b16 %v192, %v191
    %v207 = vpack.c.b16 %v194, %v193
    %v208 = vpack.c.b16 %v196, %v195
    %v209 = vpack.c.b16 %v198, %v197
    %v210 = vpack.c.b16 %v200, %v199
    %v211 = vpack.c.b16 %v202, %v201
    %v212 = vpack.c.b16 %v204, %v203
    %221 = vmatpush.bf16.msra.mxu0 %v212
    %222 = vmatpush.bf16.msra.mxu0 %v211
    %223 = vmatpush.bf16.msra.mxu0 %v210
    %224 = vmatpush.bf16.msra.mxu0 %v209
    %225 = vmatpush.bf16.msra.mxu0 %v208
    %226 = vmatpush.bf16.msra.mxu0 %v207
    %227 = vmatpush.bf16.msra.mxu0 %v206
    %228 = vmatpush.bf16.msra.mxu0 %v205
    %229 = vmatmul.bf16.gmra.mxu0 %v152
    %v230 = vpop.f32.mrf.mxu0
    %v231 = vadd.f32 %v171, %v230
    %v232 = vpop.f32.mrf.mxu0
    %233 = vdwg.mxu0
    %v234 = vsub.f32 0.0, %v231
    %v235 = vmul.f32 %v234, 1.442695
    %v236 = vpow.pop %v235
    %v237 = vadd.f32 %v236, 1.0
    %v238 = vrcp.pop %v237
    %v239 = vmul.f32 %v237, %v238
    %v240 = vsub.f32 1.0, %v239
    %v241 = vmul.f32 %v238, %v240
    %v242 = vadd.f32 %v238, %v241
    %vm243 = vweird.f32 %v237
    %vm244 = vweird.f32 %v238
    %vm245 = vmor %vm243, %vm244
    %v246 = vsel %vm245, %v238, %v242
    %v247 = vand.u32 2147483647, %v237
    %vm248 = vcmp.eq.f32.partialorder %v247, 8.507059e+37
    %v249 = vand.u32 %v237, 2147483648
    %v250 = vor.u32 1.1754944e-38, %v249
    %v251 = vsel %vm248, %v250, %v246
    %v252 = vmul.f32 1.0, %v251
    %v253 = vpack.c.bf16 %v252, %v252
    %v254 = vld [vmem:[#allocation7] sm:$0xf]
    %v255 = vld [vmem:[#allocation7 + $0x4] sm:$0xf]
    %v256 = vld [vmem:[#allocation7 + $0x8] sm:$0xf]
    %v257 = vld [vmem:[#allocation7 + $0xc] sm:$0xf]
    %v258 = vld [vmem:[#allocation7 + $0x10] sm:$0xf]
    %v259 = vld [vmem:[#allocation7 + $0x14] sm:$0xf]
    %v260 = vld [vmem:[#allocation7 + $0x18] sm:$0xf]
    %v261 = vld [vmem:[#allocation7 + $0x1c] sm:$0xf]
    %v262 = vld [vmem:[#allocation7 + $0x20] sm:$0xf]
    %v263 = vld [vmem:[#allocation7 + $0x24] sm:$0xf]
    %v264 = vld [vmem:[#allocation7 + $0x28] sm:$0xf]
    %v265 = vld [vmem:[#allocation7 + $0x2c] sm:$0xf]
    %v266 = vld [vmem:[#allocation7 + $0x30] sm:$0xf]
    %v267 = vld [vmem:[#allocation7 + $0x34] sm:$0xf]
    %v268 = vld [vmem:[#allocation7 + $0x38] sm:$0xf]
    %v269 = vld [vmem:[#allocation7 + $0x3c] sm:$0xf]
    %v270 = vld [vmem:[%s4] sm:$0x1]
    %v272 = vperm.slane %v270, 0
    %v290 = vunpack.c.l.b16 %v254
    %v291 = vunpack.c.l.b16 %v255
    %v292 = vunpack.c.l.b16 %v256
    %v293 = vunpack.c.l.b16 %v257
    %v294 = vunpack.c.l.b16 %v258
    %v295 = vunpack.c.l.b16 %v259
    %v296 = vunpack.c.l.b16 %v260
    %v297 = vunpack.c.l.b16 %v261
    %v298 = vunpack.c.l.b16 %v262
    %v299 = vunpack.c.l.b16 %v263
    %v300 = vunpack.c.l.b16 %v264
    %v301 = vunpack.c.l.b16 %v265
    %v302 = vunpack.c.l.b16 %v266
    %v303 = vunpack.c.l.b16 %v267
    %v304 = vunpack.c.l.b16 %v268
    %v305 = vunpack.c.l.b16 %v269
    %v306 = vpack.c.b16 %v291, %v290
    %v307 = vpack.c.b16 %v293, %v292
    %v308 = vpack.c.b16 %v295, %v294
    %v309 = vpack.c.b16 %v297, %v296
    %v310 = vpack.c.b16 %v299, %v298
    %v311 = vpack.c.b16 %v301, %v300
    %v312 = vpack.c.b16 %v303, %v302
    %v313 = vpack.c.b16 %v305, %v304
    %322 = vmatpush.bf16.msra.mxu0 %v313
    %323 = vmatpush.bf16.msra.mxu0 %v312
    %324 = vmatpush.bf16.msra.mxu0 %v311
    %325 = vmatpush.bf16.msra.mxu0 %v310
    %326 = vmatpush.bf16.msra.mxu0 %v309
    %327 = vmatpush.bf16.msra.mxu0 %v308
    %328 = vmatpush.bf16.msra.mxu0 %v307
    %329 = vmatpush.bf16.msra.mxu0 %v306
    %330 = vmatmul.bf16.gmra.mxu0 %v253
    %v331 = vpop.f32.mrf.mxu0
    %v332 = vadd.f32 %v272, %v331
    %v333 = vpop.f32.mrf.mxu0
    %334 = vdwg.mxu0
    %v335 = vsub.f32 0.0, %v332
    %v336 = vmul.f32 %v335, 1.442695
    %v337 = vpow.pop %v336
    %v338 = vadd.f32 %v337, 1.0
    %v339 = vrcp.pop %v338
    %v340 = vmul.f32 %v338, %v339
    %v341 = vsub.f32 1.0, %v340
    %v342 = vmul.f32 %v339, %v341
    %v343 = vadd.f32 %v339, %v342
    %vm344 = vweird.f32 %v338
    %vm345 = vweird.f32 %v339
    %vm346 = vmor %vm344, %vm345
    %v347 = vsel %vm346, %v339, %v343
    %v348 = vand.u32 2147483647, %v338
    %vm349 = vcmp.eq.f32.partialorder %v348, 8.507059e+37
    %v350 = vand.u32 %v338, 2147483648
    %v351 = vor.u32 1.1754944e-38, %v350
    %v352 = vsel %vm349, %v351, %v347
    %v353 = vmul.f32 1.0, %v352
    %v354 = vpack.c.bf16 %v353, %v353
    %v355 = vld [vmem:[#allocation8] sm:$0xf]
    %v356 = vld [vmem:[#allocation8 + $0x4] sm:$0xf]
    %v357 = vld [vmem:[#allocation8 + $0x8] sm:$0xf]
    %v358 = vld [vmem:[#allocation8 + $0xc] sm:$0xf]
    %v359 = vld [vmem:[#allocation8 + $0x10] sm:$0xf]
    %v360 = vld [vmem:[#allocation8 + $0x14] sm:$0xf]
    %v361 = vld [vmem:[#allocation8 + $0x18] sm:$0xf]
    %v362 = vld [vmem:[#allocation8 + $0x1c] sm:$0xf]
    %v363 = vld [vmem:[#allocation8 + $0x20] sm:$0xf]
    %v364 = vld [vmem:[#allocation8 + $0x24] sm:$0xf]
    %v365 = vld [vmem:[#allocation8 + $0x28] sm:$0xf]
    %v366 = vld [vmem:[#allocation8 + $0x2c] sm:$0xf]
    %v367 = vld [vmem:[#allocation8 + $0x30] sm:$0xf]
    %v368 = vld [vmem:[#allocation8 + $0x34] sm:$0xf]
    %v369 = vld [vmem:[#allocation8 + $0x38] sm:$0xf]
    %v370 = vld [vmem:[#allocation8 + $0x3c] sm:$0xf]
    %v371 = vld [vmem:[%s6] sm:$0x1]
    %v373 = vperm.slane %v371, 0
    %v391 = vunpack.c.l.b16 %v355
    %v392 = vunpack.c.l.b16 %v356
    %v393 = vunpack.c.l.b16 %v357
    %v394 = vunpack.c.l.b16 %v358
    %v395 = vunpack.c.l.b16 %v359
    %v396 = vunpack.c.l.b16 %v360
    %v397 = vunpack.c.l.b16 %v361
    %v398 = vunpack.c.l.b16 %v362
    %v399 = vunpack.c.l.b16 %v363
    %v400 = vunpack.c.l.b16 %v364
    %v401 = vunpack.c.l.b16 %v365
    %v402 = vunpack.c.l.b16 %v366
    %v403 = vunpack.c.l.b16 %v367
    %v404 = vunpack.c.l.b16 %v368
    %v405 = vunpack.c.l.b16 %v369
    %v406 = vunpack.c.l.b16 %v370
    %v407 = vpack.c.b16 %v392, %v391
    %v408 = vpack.c.b16 %v394, %v393
    %v409 = vpack.c.b16 %v396, %v395
    %v410 = vpack.c.b16 %v398, %v397
    %v411 = vpack.c.b16 %v400, %v399
    %v412 = vpack.c.b16 %v402, %v401
    %v413 = vpack.c.b16 %v404, %v403
    %v414 = vpack.c.b16 %v406, %v405
    %423 = vmatpush.bf16.msra.mxu0 %v414
    %424 = vmatpush.bf16.msra.mxu0 %v413
    %425 = vmatpush.bf16.msra.mxu0 %v412
    %426 = vmatpush.bf16.msra.mxu0 %v411
    %427 = vmatpush.bf16.msra.mxu0 %v410
    %428 = vmatpush.bf16.msra.mxu0 %v409
    %429 = vmatpush.bf16.msra.mxu0 %v408
    %430 = vmatpush.bf16.msra.mxu0 %v407
    %431 = vmatmul.bf16.gmra.mxu0 %v354
    %v432 = vpop.f32.mrf.mxu0
    %v433 = vadd.f32 %v373, %v432
    %v434 = vpop.f32.mrf.mxu0
    %435 = vdwg.mxu0
    %v436 = vsub.f32 0.0, %v433
    %v437 = vmul.f32 %v436, 1.442695
    %v438 = vpow.pop %v437
    %v439 = vadd.f32 %v438, 1.0
    %v440 = vrcp.pop %v439
    %v441 = vmul.f32 %v439, %v440
    %v442 = vsub.f32 1.0, %v441
    %v443 = vmul.f32 %v440, %v442
    %v444 = vadd.f32 %v440, %v443
    %vm445 = vweird.f32 %v439
    %vm446 = vweird.f32 %v440
    %vm447 = vmor %vm445, %vm446
    %v448 = vsel %vm447, %v440, %v444
    %v449 = vand.u32 2147483647, %v439
    %vm450 = vcmp.eq.f32.partialorder %v449, 8.507059e+37
    %v451 = vand.u32 %v439, 2147483648
    %v452 = vor.u32 1.1754944e-38, %v451
    %v453 = vsel %vm450, %v452, %v448
    %v454 = vmul.f32 1.0, %v453
    %v455 = vpack.c.bf16 %v454, %v454
    %v456 = vld [vmem:[#allocation10] sm:$0xf]
    %v457 = vld [vmem:[#allocation10 + $0x4] sm:$0xf]
    %v458 = vld [vmem:[#allocation10 + $0x8] sm:$0xf]
    %v459 = vld [vmem:[#allocation10 + $0xc] sm:$0xf]
    %v460 = vld [vmem:[#allocation10 + $0x10] sm:$0xf]
    %v461 = vld [vmem:[#allocation10 + $0x14] sm:$0xf]
    %v462 = vld [vmem:[#allocation10 + $0x18] sm:$0xf]
    %v463 = vld [vmem:[#allocation10 + $0x1c] sm:$0xf]
    %v464 = vld [vmem:[#allocation10 + $0x20] sm:$0xf]
    %v465 = vld [vmem:[#allocation10 + $0x24] sm:$0xf]
    %v466 = vld [vmem:[#allocation10 + $0x28] sm:$0xf]
    %v467 = vld [vmem:[#allocation10 + $0x2c] sm:$0xf]
    %v468 = vld [vmem:[#allocation10 + $0x30] sm:$0xf]
    %v469 = vld [vmem:[#allocation10 + $0x34] sm:$0xf]
    %v470 = vld [vmem:[#allocation10 + $0x38] sm:$0xf]
    %v471 = vld [vmem:[#allocation10 + $0x3c] sm:$0xf]
    %v472 = vld [vmem:[%s8] sm:$0x1]
    %v474 = vperm.slane %v472, 0
    %v492 = vunpack.c.l.b16 %v456
    %v493 = vunpack.c.l.b16 %v457
    %v494 = vunpack.c.l.b16 %v458
    %v495 = vunpack.c.l.b16 %v459
    %v496 = vunpack.c.l.b16 %v460
    %v497 = vunpack.c.l.b16 %v461
    %v498 = vunpack.c.l.b16 %v462
    %v499 = vunpack.c.l.b16 %v463
    %v500 = vunpack.c.l.b16 %v464
    %v501 = vunpack.c.l.b16 %v465
    %v502 = vunpack.c.l.b16 %v466
    %v503 = vunpack.c.l.b16 %v467
    %v504 = vunpack.c.l.b16 %v468
    %v505 = vunpack.c.l.b16 %v469
    %v506 = vunpack.c.l.b16 %v470
    %v507 = vunpack.c.l.b16 %v471
    %v508 = vpack.c.b16 %v493, %v492
    %v509 = vpack.c.b16 %v495, %v494
    %v510 = vpack.c.b16 %v497, %v496
    %v511 = vpack.c.b16 %v499, %v498
    %v512 = vpack.c.b16 %v501, %v500
    %v513 = vpack.c.b16 %v503, %v502
    %v514 = vpack.c.b16 %v505, %v504
    %v515 = vpack.c.b16 %v507, %v506
    %524 = vmatpush.bf16.msra.mxu0 %v515
    %525 = vmatpush.bf16.msra.mxu0 %v514
    %526 = vmatpush.bf16.msra.mxu0 %v513
    %527 = vmatpush.bf16.msra.mxu0 %v512
    %528 = vmatpush.bf16.msra.mxu0 %v511
    %529 = vmatpush.bf16.msra.mxu0 %v510
    %530 = vmatpush.bf16.msra.mxu0 %v509
    %531 = vmatpush.bf16.msra.mxu0 %v508
    %532 = vmatmul.bf16.gmra.mxu0 %v455
    %v533 = vpop.f32.mrf.mxu0
    %v534 = vadd.f32 %v474, %v533
    %v535 = vpop.f32.mrf.mxu0
    %536 = vdwg.mxu0
    %v537 = vsub.f32 0.0, %v534
    %v538 = vmul.f32 %v537, 1.442695
    %v539 = vpow.pop %v538
    %v540 = vadd.f32 %v539, 1.0
    %v541 = vrcp.pop %v540
    %v542 = vmul.f32 %v540, %v541
    %v543 = vsub.f32 1.0, %v542
    %v544 = vmul.f32 %v541, %v543
    %v545 = vadd.f32 %v541, %v544
    %vm546 = vweird.f32 %v540
    %vm547 = vweird.f32 %v541
    %vm548 = vmor %vm546, %vm547
    %v549 = vsel %vm548, %v541, %v545
    %v550 = vand.u32 2147483647, %v540
    %vm551 = vcmp.eq.f32.partialorder %v550, 8.507059e+37
    %v552 = vand.u32 %v540, 2147483648
    %v553 = vor.u32 1.1754944e-38, %v552
    %v554 = vsel %vm551, %v553, %v549
    %v555 = vmul.f32 1.0, %v554
    %v556 = vpack.c.bf16 %v555, %v555
    %v557 = vld [vmem:[#allocation11] sm:$0xf]
    %v558 = vld [vmem:[#allocation11 + $0x4] sm:$0xf]
    %v559 = vld [vmem:[#allocation11 + $0x8] sm:$0xf]
    %v560 = vld [vmem:[#allocation11 + $0xc] sm:$0xf]
    %v561 = vld [vmem:[#allocation11 + $0x10] sm:$0xf]
    %v562 = vld [vmem:[#allocation11 + $0x14] sm:$0xf]
    %v563 = vld [vmem:[#allocation11 + $0x18] sm:$0xf]
    %v564 = vld [vmem:[#allocation11 + $0x1c] sm:$0xf]
    %v565 = vld [vmem:[#allocation11 + $0x20] sm:$0xf]
    %v566 = vld [vmem:[#allocation11 + $0x24] sm:$0xf]
    %v567 = vld [vmem:[#allocation11 + $0x28] sm:$0xf]
    %v568 = vld [vmem:[#allocation11 + $0x2c] sm:$0xf]
    %v569 = vld [vmem:[#allocation11 + $0x30] sm:$0xf]
    %v570 = vld [vmem:[#allocation11 + $0x34] sm:$0xf]
    %v571 = vld [vmem:[#allocation11 + $0x38] sm:$0xf]
    %v572 = vld [vmem:[#allocation11 + $0x3c] sm:$0xf]
    %v573 = vld [vmem:[%s10] sm:$0x1]
    %v575 = vperm.slane %v573, 0
    %v593 = vunpack.c.l.b16 %v557
    %v594 = vunpack.c.l.b16 %v558
    %v595 = vunpack.c.l.b16 %v559
    %v596 = vunpack.c.l.b16 %v560
    %v597 = vunpack.c.l.b16 %v561
    %v598 = vunpack.c.l.b16 %v562
    %v599 = vunpack.c.l.b16 %v563
    %v600 = vunpack.c.l.b16 %v564
    %v601 = vunpack.c.l.b16 %v565
    %v602 = vunpack.c.l.b16 %v566
    %v603 = vunpack.c.l.b16 %v567
    %v604 = vunpack.c.l.b16 %v568
    %v605 = vunpack.c.l.b16 %v569
    %v606 = vunpack.c.l.b16 %v570
    %v607 = vunpack.c.l.b16 %v571
    %v608 = vunpack.c.l.b16 %v572
    %v609 = vpack.c.b16 %v594, %v593
    %v610 = vpack.c.b16 %v596, %v595
    %v611 = vpack.c.b16 %v598, %v597
    %v612 = vpack.c.b16 %v600, %v599
    %v613 = vpack.c.b16 %v602, %v601
    %v614 = vpack.c.b16 %v604, %v603
    %v615 = vpack.c.b16 %v606, %v605
    %v616 = vpack.c.b16 %v608, %v607
    %625 = vmatpush.bf16.msra.mxu0 %v616
    %626 = vmatpush.bf16.msra.mxu0 %v615
    %627 = vmatpush.bf16.msra.mxu0 %v614
    %628 = vmatpush.bf16.msra.mxu0 %v613
    %629 = vmatpush.bf16.msra.mxu0 %v612
    %630 = vmatpush.bf16.msra.mxu0 %v611
    %631 = vmatpush.bf16.msra.mxu0 %v610
    %632 = vmatpush.bf16.msra.mxu0 %v609
    %633 = vmatmul.bf16.gmra.mxu0 %v556
    %v634 = vpop.f32.mrf.mxu0
    %v635 = vadd.f32 %v575, %v634
    %v636 = vpop.f32.mrf.mxu0
    %637 = vdwg.mxu0
    %v638 = vsub.f32 0.0, %v635
    %v639 = vmul.f32 %v638, 1.442695
    %v640 = vpow.pop %v639
    %v641 = vadd.f32 %v640, 1.0
    %v642 = vrcp.pop %v641
    %v643 = vmul.f32 %v641, %v642
    %v644 = vsub.f32 1.0, %v643
    %v645 = vmul.f32 %v642, %v644
    %v646 = vadd.f32 %v642, %v645
    %vm647 = vweird.f32 %v641
    %vm648 = vweird.f32 %v642
    %vm649 = vmor %vm647, %vm648
    %v650 = vsel %vm649, %v642, %v646
    %v651 = vand.u32 2147483647, %v641
    %vm652 = vcmp.eq.f32.partialorder %v651, 8.507059e+37
    %v653 = vand.u32 %v641, 2147483648
    %v654 = vor.u32 1.1754944e-38, %v653
    %v655 = vsel %vm652, %v654, %v650
    %v656 = vmul.f32 1.0, %v655
    %v657 = vpack.c.bf16 %v656, %v656
    %v658 = vld [vmem:[#allocation13] sm:$0xf]
    %v659 = vld [vmem:[#allocation13 + $0x4] sm:$0xf]
    %v660 = vld [vmem:[#allocation13 + $0x8] sm:$0xf]
    %v661 = vld [vmem:[#allocation13 + $0xc] sm:$0xf]
    %v662 = vld [vmem:[#allocation13 + $0x10] sm:$0xf]
    %v663 = vld [vmem:[#allocation13 + $0x14] sm:$0xf]
    %v664 = vld [vmem:[#allocation13 + $0x18] sm:$0xf]
    %v665 = vld [vmem:[#allocation13 + $0x1c] sm:$0xf]
    %v666 = vld [vmem:[#allocation13 + $0x20] sm:$0xf]
    %v667 = vld [vmem:[#allocation13 + $0x24] sm:$0xf]
    %v668 = vld [vmem:[#allocation13 + $0x28] sm:$0xf]
    %v669 = vld [vmem:[#allocation13 + $0x2c] sm:$0xf]
    %v670 = vld [vmem:[#allocation13 + $0x30] sm:$0xf]
    %v671 = vld [vmem:[#allocation13 + $0x34] sm:$0xf]
    %v672 = vld [vmem:[#allocation13 + $0x38] sm:$0xf]
    %v673 = vld [vmem:[#allocation13 + $0x3c] sm:$0xf]
    %v674 = vld [vmem:[%s12] sm:$0x1]
    %v676 = vperm.slane %v674, 0
    %v694 = vunpack.c.l.b16 %v658
    %v695 = vunpack.c.l.b16 %v659
    %v696 = vunpack.c.l.b16 %v660
    %v697 = vunpack.c.l.b16 %v661
    %v698 = vunpack.c.l.b16 %v662
    %v699 = vunpack.c.l.b16 %v663
    %v700 = vunpack.c.l.b16 %v664
    %v701 = vunpack.c.l.b16 %v665
    %v702 = vunpack.c.l.b16 %v666
    %v703 = vunpack.c.l.b16 %v667
    %v704 = vunpack.c.l.b16 %v668
    %v705 = vunpack.c.l.b16 %v669
    %v706 = vunpack.c.l.b16 %v670
    %v707 = vunpack.c.l.b16 %v671
    %v708 = vunpack.c.l.b16 %v672
    %v709 = vunpack.c.l.b16 %v673
    %v710 = vpack.c.b16 %v695, %v694
    %v711 = vpack.c.b16 %v697, %v696
    %v712 = vpack.c.b16 %v699, %v698
    %v713 = vpack.c.b16 %v701, %v700
    %v714 = vpack.c.b16 %v703, %v702
    %v715 = vpack.c.b16 %v705, %v704
    %v716 = vpack.c.b16 %v707, %v706
    %v717 = vpack.c.b16 %v709, %v708
    %726 = vmatpush.bf16.msra.mxu0 %v717
    %727 = vmatpush.bf16.msra.mxu0 %v716
    %728 = vmatpush.bf16.msra.mxu0 %v715
    %729 = vmatpush.bf16.msra.mxu0 %v714
    %730 = vmatpush.bf16.msra.mxu0 %v713
    %731 = vmatpush.bf16.msra.mxu0 %v712
    %732 = vmatpush.bf16.msra.mxu0 %v711
    %733 = vmatpush.bf16.msra.mxu0 %v710
    %734 = vmatmul.bf16.gmra.mxu0 %v657
    %v735 = vpop.f32.mrf.mxu0
    %v736 = vadd.f32 %v676, %v735
    %v737 = vpop.f32.mrf.mxu0
    %738 = vdwg.mxu0
    %v739 = vlaneseq
    %v740 = vand.u32 %v739, 127
    %vm741 = vcmp.lt.s32.totalorder %v740, 10
    %v742 = vsel %vm741, %v736, -1e+30
    %743 = vmax.xlane.f32.xlu0 %v742
    %v744 = vpop.xlane.xlu0 %743
    %v745 = vsub.f32 %v742, %v744
    %v746 = vmul.f32 %v745, 1.442695
    %v747 = vpow.pop %v746
    %748 = vadd.xlane.f32.xlu0 %v747
    %v749 = vpop.xlane.xlu0 %748
    %v750 = vlog2.pop %v749
    %v751 = vmul.f32 %v750, 0.6931472
    %v752 = vsub.f32 %v745, %v751
    %753 = vst [vmem:[#allocation14] sm:$0xff] %v752
    // Predicated region
    $region82: #{tpu_custom_call.1} parent=1 // pred_check
      _
    $region83: #{tpu_custom_call.1} parent=1 // pred_check_branch
      %755 = sbr.rel (0) target = $region85
    $region84: #{tpu_custom_call.1} parent=1 // pred_region
      %757 = vsyncadd [#allocation4], 0
      %s759 = sshll.u32 [#allocation14], 4
      %s760 = int_to_ptr.vmem [resolvable:$true] %s759
      %s761 = sshll.u32 %s13, 4
      %s762 = int_to_ptr.hbm [resolvable:$true] %s761
      %764 = dma.vmem_to_hbm [thread:$0]  %s760, 128, %s762, [#allocation4]
    $region85: #{tpu_custom_call.1} parent=1 // pred_fallthru
      _
    // Predicated region
    $region86: #{tpu_custom_call.1} parent=1 // pred_check
      _
    $region87: #{tpu_custom_call.1} parent=1 // pred_check_branch
      %766 = sbr.rel (0) target = $region89
    $region88: #{tpu_custom_call.1} parent=1 // pred_region
      %768 = dma.done [#allocation4], 128
    $region89: #{tpu_custom_call.1} parent=1 // pred_fallthru
      _
    %769 = vsyncpa [#allocation3], 1
    %770 = vsyncpa [#allocation6], 1
    %771 = vsyncpa [#allocation9], 1
    %772 = vsyncpa [#allocation12], 1
    %773 = vsyncpa [#allocation4], 1

</llo_original>
